<compile_context>
chip_gen: v7x
topology: tpu7x:2x2x1
jax: 0.10.0
libtpu: 0.0.40
codegen_flags: <defaults>
</compile_context>

<pallas_src>
from functools import partial

import jax
import jax.numpy as jnp
from jax.experimental import pallas as pl
from jax.experimental.pallas import tpu as pltpu


def _round_up(x, m):
    return ((x + m - 1) // m) * m


def critic_kernel(x_ref, w1_ref, b1_ref, w2_ref, b2_ref, w3_ref, b3_ref, o_ref):
    """One batch tile. All activations carry batch on the lane (last) axis.

    x_ref : (S_pad, TILE_B)  bf16
    w1_ref: (H1p, S_pad)     bf16     b1_ref: (H1p, 1) f32
    w2_ref: (H2p, H1p)       bf16     b2_ref: (H2p, 1) f32
    w3_ref: (H2p, 1)         f32      b3_ref: (1, 1)   f32
    o_ref : (1, TILE_B)      f32
    """
    x = x_ref[...]

    # Layer 1: MXU matmul (bf16 operands, f32 accumulation) + f32 bias + f32 tanh (EUP).
    h1 = jnp.tanh(
        jnp.dot(w1_ref[...], x, preferred_element_type=jnp.float32) + b1_ref[...]
    )

    # Layer 2: cast activations to bf16 only for the MXU operand; math stays f32.
    h2 = jnp.tanh(
        jnp.dot(w2_ref[...], h1.astype(jnp.bfloat16),
                preferred_element_type=jnp.float32)
        + b2_ref[...]
    )

    # Layer 3 (hidden2 -> 1): VPU multiply + sublane reduce (XLU). The result already
    # has batch on the 128-lane axis -> dense, unmasked store.
    v = jnp.sum(h2 * w3_ref[...], axis=0, keepdims=True) + b3_ref[...]
    o_ref[...] = v.astype(o_ref.dtype)


@partial(jax.jit, static_argnames=("tile_b",))
def critic_forward(state, packed_params, tile_b=256):
    """state: (B, state_dim) f32 -> value: (B, 1) f32."""
    assert tile_b % 128 == 0, "tile_b must be a multiple of 128 (lane width)"
    w1t, b1c, w2t, b2c, w3c, b3s = packed_params
    B, S = state.shape
    H1p, S_pad = w1t.shape
    H2p = w2t.shape[0]
    assert S <= S_pad, "state_dim does not match packed parameters"

    num_tiles = pl.cdiv(B, tile_b)
    B_pad = num_tiles * tile_b

    # Wrapper-side layout plumbing: transpose + zero-pad the state so batch sits on the
    # lane axis inside the kernel; cast the MXU operand to bf16 here.
    xt = jnp.zeros((S_pad, B_pad), jnp.bfloat16)
    xt = xt.at[:S, :B].set(state.T.astype(jnp.bfloat16))

    # Resident (non-tiled) operands: full-array blocks, constant index_map.
    full = lambda arr: pl.BlockSpec(arr.shape, lambda i: (0, 0))

    flops = 2 * B_pad * (S_pad * H1p + H1p * H2p + H2p)
    transcendentals = B_pad * (H1p + H2p)
    bytes_accessed = (
        xt.size * xt.dtype.itemsize
        + sum(a.size * a.dtype.itemsize for a in packed_params)
        + B_pad * 4
    )

    out = pl.pallas_call(
        critic_kernel,
        out_shape=jax.ShapeDtypeStruct((1, B_pad), jnp.float32),
        grid=(num_tiles,),
        in_specs=[
            pl.BlockSpec((S_pad, tile_b), lambda i: (0, i)),  # batch-tiled state
            full(w1t), full(b1c),
            full(w2t), full(b2c),
            full(w3c), full(b3s),
        ],
        out_specs=pl.BlockSpec((1, tile_b), lambda i: (0, i)),
        compiler_params=pltpu.CompilerParams(
            dimension_semantics=("parallel",),  # megacore-shard batch tiles on v7x
        ),
        cost_estimate=pl.CostEstimate(
            flops=int(flops),
            transcendentals=int(transcendentals),
            bytes_accessed=int(bytes_accessed),
        ),
    )(xt, w1t, b1c, w2t, b2c, w3c, b3s)

    # Drop padded batch columns; present the PyTorch-shaped (B, 1) value.
    return out[0, :B].reshape(B, 1)


def init_params(key, state_dim, hidden_dims=(128, 64)):
    """Deterministic synthetic init mimicking nn.Linear's uniform scale.

    Returns logical (unpadded) [(w, b), ...] with w: (in_dim, out_dim), b: (out_dim,)
    so layer(x) = x @ w + b (equivalent to torch's x @ W.T + b with our own init).
    """
    dims = [state_dim] + list(hidden_dims) + [1]
    params = []
    for din, dout in zip(dims[:-1], dims[1:]):
        key, kw, kb = jax.random.split(key, 3)
        bound = float(din) ** -0.5
        w = jax.random.uniform(kw, (din, dout), jnp.float32, -bound, bound)
        b = jax.random.uniform(kb, (dout,), jnp.float32, -bound, bound)
        params.append((w, b))
    return params


def pack_params(raw_params):
    """Transpose, zero-pad and cast parameters into the kernel's resident layout."""
    (w1, b1), (w2, b2), (w3, b3) = raw_params
    S, H1 = w1.shape
    H2 = w2.shape[1]
    S_pad = _round_up(S, 16)      # bf16 sublane packing
    H1p = _round_up(H1, 128)
    H2p = _round_up(H2, 128)      # pad hidden2 64 -> 128 with zeros (free arithmetic)

    w1t = jnp.zeros((H1p, S_pad), jnp.bfloat16).at[:H1, :S].set(w1.T.astype(jnp.bfloat16))
    b1c = jnp.zeros((H1p, 1), jnp.float32).at[:H1, 0].set(b1)
    w2t = jnp.zeros((H2p, H1p), jnp.bfloat16).at[:H2, :H1].set(w2.T.astype(jnp.bfloat16))
    b2c = jnp.zeros((H2p, 1), jnp.float32).at[:H2, 0].set(b2)
    w3c = jnp.zeros((H2p, 1), jnp.float32).at[:H2, 0].set(w3[:, 0])
    b3s = b3.reshape(1, 1).astype(jnp.float32)
    return (w1t, b1c, w2t, b2c, w3c, b3s)


def critic_reference(state, raw_params, match_bf16=True):
    """Pure-JAX reference. match_bf16=True mirrors the kernel's bf16 MXU operands."""
    (w1, b1), (w2, b2), (w3, b3) = raw_params

    def mm(a, b):
        if match_bf16:
            a = a.astype(jnp.bfloat16)
            b = b.astype(jnp.bfloat16)
        return jnp.dot(a, b, preferred_element_type=jnp.float32)

    h1 = jnp.tanh(mm(state, w1) + b1)
    h2 = jnp.tanh(mm(h1, w2) + b2)
    return jnp.sum(h2 * w3[:, 0], axis=-1, keepdims=True) + b3


if __name__ == "__main__":
    key = jax.random.PRNGKey(0)
    k_params, k_s1, k_s2 = jax.random.split(key, 3)

    state_dim = 16
    raw_params = init_params(k_params, state_dim, hidden_dims=(128, 64))
    packed = pack_params(raw_params)

    # Small batch (single tile; batch zero-padded up to TILE_B inside the wrapper).
    state = jax.random.normal(k_s1, (8, state_dim), jnp.float32)
    value = jax.block_until_ready(critic_forward(state, packed, tile_b=128))
    assert value.shape == (8, 1)
    ref_bf16 = critic_reference(state, raw_params, match_bf16=True)
    ref_f32 = critic_reference(state, raw_params, match_bf16=False)
    assert jnp.allclose(value, ref_bf16, atol=2e-3, rtol=2e-3), "mismatch vs bf16 reference"
    assert jnp.allclose(value, ref_f32, atol=5e-2, rtol=5e-2), "mismatch vs f32 reference"

    # Multi-tile, non-multiple-of-tile batch (exercises grid pipelining + tail padding).
    state2 = jax.random.normal(k_s2, (300, state_dim), jnp.float32)
    value2 = jax.block_until_ready(critic_forward(state2, packed, tile_b=128))
    assert value2.shape == (300, 1)
    ref2 = critic_reference(state2, raw_params, match_bf16=True)
    assert jnp.allclose(value2, ref2, atol=2e-3, rtol=2e-3), "mismatch (multi-tile)"

    print("KERNEL_OK")
</pallas_src>

<mosaic_0001>
module attributes {stable_mosaic.version = 11 : i64} {
  func.func @critic_kernel(%arg0: i32, %arg1: memref<16x128xbf16, #tpu.memory_space<vmem>>, %arg2: memref<128x16xbf16, #tpu.memory_space<vmem>>, %arg3: memref<128x1xf32, #tpu.memory_space<vmem>>, %arg4: memref<128x128xbf16, #tpu.memory_space<vmem>>, %arg5: memref<128x1xf32, #tpu.memory_space<vmem>>, %arg6: memref<128x1xf32, #tpu.memory_space<vmem>>, %arg7: memref<1x1xf32, #tpu.memory_space<vmem>>, %arg8: memref<1x128xf32, #tpu.memory_space<vmem>>) attributes {dimension_semantics = [#tpu.dimension_semantics<parallel>], iteration_bounds = array<i64: 1>, scalar_prefetch = 0 : i64, scratch_operands = 0 : i64, tpu.core_type = #tpu.core_type<tc>, window_params = [{transform_indices = @transform_0, window_bounds = array<i64: 16, 128>}, {pipeline_mode = #tpu.pipeline_mode<synchronous>, transform_indices = @transform_1, window_bounds = array<i64: 128, 16>}, {pipeline_mode = #tpu.pipeline_mode<synchronous>, transform_indices = @transform_2, window_bounds = array<i64: 128, 1>}, {pipeline_mode = #tpu.pipeline_mode<synchronous>, transform_indices = @transform_3, window_bounds = array<i64: 128, 128>}, {pipeline_mode = #tpu.pipeline_mode<synchronous>, transform_indices = @transform_4, window_bounds = array<i64: 128, 1>}, {pipeline_mode = #tpu.pipeline_mode<synchronous>, transform_indices = @transform_5, window_bounds = array<i64: 128, 1>}, {pipeline_mode = #tpu.pipeline_mode<synchronous>, transform_indices = @transform_6, window_bounds = array<i64: 1, 1>}, {transform_indices = @transform_7, window_bounds = array<i64: 1, 128>}]} {
    %c0 = arith.constant 0 : index
    %c0_0 = arith.constant 0 : index
    %0 = vector.load %arg1[%c0, %c0_0] : memref<16x128xbf16, #tpu.memory_space<vmem>>, vector<16x128xbf16>
    %c0_1 = arith.constant 0 : index
    %c0_2 = arith.constant 0 : index
    %1 = vector.load %arg2[%c0_1, %c0_2] : memref<128x16xbf16, #tpu.memory_space<vmem>>, vector<128x16xbf16>
    %cst = arith.constant dense<0.000000e+00> : vector<128x128xf32>
    %2 = tpu.matmul %1, %0, %cst {dimension_numbers = #tpu.dot_dimension_numbers<[1], [0], [0], [1], [0, 0, 1, 1], [], []>} : vector<128x16xbf16>, vector<16x128xbf16>, vector<128x128xf32> -> vector<128x128xf32>
    %c0_3 = arith.constant 0 : index
    %c0_4 = arith.constant 0 : index
    %3 = vector.load %arg3[%c0_3, %c0_4] : memref<128x1xf32, #tpu.memory_space<vmem>>, vector<128x1xf32>
    %4 = vector.broadcast %3 : vector<128x1xf32> to vector<128x128xf32>
    %5 = arith.addf %2, %4 : vector<128x128xf32>
    %6 = math.tanh %5 : vector<128x128xf32>
    %c0_5 = arith.constant 0 : index
    %c0_6 = arith.constant 0 : index
    %7 = vector.load %arg4[%c0_5, %c0_6] : memref<128x128xbf16, #tpu.memory_space<vmem>>, vector<128x128xbf16>
    %8 = arith.truncf %6 : vector<128x128xf32> to vector<128x128xbf16>
    %cst_7 = arith.constant dense<0.000000e+00> : vector<128x128xf32>
    %9 = tpu.matmul %7, %8, %cst_7 {dimension_numbers = #tpu.dot_dimension_numbers<[1], [0], [0], [1], [0, 0, 1, 1], [], []>} : vector<128x128xbf16>, vector<128x128xbf16>, vector<128x128xf32> -> vector<128x128xf32>
    %c0_8 = arith.constant 0 : index
    %c0_9 = arith.constant 0 : index
    %10 = vector.load %arg5[%c0_8, %c0_9] : memref<128x1xf32, #tpu.memory_space<vmem>>, vector<128x1xf32>
    %11 = vector.broadcast %10 : vector<128x1xf32> to vector<128x128xf32>
    %12 = arith.addf %9, %11 : vector<128x128xf32>
    %13 = math.tanh %12 : vector<128x128xf32>
    %c0_10 = arith.constant 0 : index
    %c0_11 = arith.constant 0 : index
    %14 = vector.load %arg6[%c0_10, %c0_11] : memref<128x1xf32, #tpu.memory_space<vmem>>, vector<128x1xf32>
    %15 = vector.broadcast %14 : vector<128x1xf32> to vector<128x128xf32>
    %16 = arith.mulf %13, %15 : vector<128x128xf32>
    %cst_12 = arith.constant dense<0.000000e+00> : vector<128xf32>
    %17 = vector.multi_reduction <add>, %16, %cst_12 [0] : vector<128x128xf32> to vector<128xf32>
    %18 = vector.shape_cast %17 : vector<128xf32> to vector<1x128xf32>
    %c0_13 = arith.constant 0 : index
    %c0_14 = arith.constant 0 : index
    %19 = vector.load %arg7[%c0_13, %c0_14] : memref<1x1xf32, #tpu.memory_space<vmem>>, vector<1x1xf32>
    %20 = vector.broadcast %19 : vector<1x1xf32> to vector<1x128xf32>
    %21 = arith.addf %18, %20 : vector<1x128xf32>
    %c0_15 = arith.constant 0 : index
    %c0_16 = arith.constant 0 : index
    %22 = vector.load %arg8[%c0_15, %c0_16] : memref<1x128xf32, #tpu.memory_space<vmem>>, vector<1x128xf32>
    tpu.vector_store %arg8[%c0_15, %c0_16], %21 {strides = array<i32>} : memref<1x128xf32, #tpu.memory_space<vmem>>, vector<1x128xf32>,
    return
  }
  func.func @transform_0(%arg0: i32) -> (i32, i32) {
    %c0_i32 = arith.constant 0 : i32
    %c0_i32_0 = arith.constant 0 : i32
    return %c0_i32, %arg0 : i32, i32
  }
  func.func @transform_1(%arg0: i32) -> (i32, i32) {
    %c0_i32 = arith.constant 0 : i32
    %c0_i32_0 = arith.constant 0 : i32
    %c0_i32_1 = arith.constant 0 : i32
    return %c0_i32, %c0_i32_0 : i32, i32
  }
  func.func @transform_2(%arg0: i32) -> (i32, i32) {
    %c0_i32 = arith.constant 0 : i32
    %c0_i32_0 = arith.constant 0 : i32
    %c0_i32_1 = arith.constant 0 : i32
    return %c0_i32, %c0_i32_0 : i32, i32
  }
  func.func @transform_3(%arg0: i32) -> (i32, i32) {
    %c0_i32 = arith.constant 0 : i32
    %c0_i32_0 = arith.constant 0 : i32
    %c0_i32_1 = arith.constant 0 : i32
    return %c0_i32, %c0_i32_0 : i32, i32
  }
  func.func @transform_4(%arg0: i32) -> (i32, i32) {
    %c0_i32 = arith.constant 0 : i32
    %c0_i32_0 = arith.constant 0 : i32
    %c0_i32_1 = arith.constant 0 : i32
    return %c0_i32, %c0_i32_0 : i32, i32
  }
  func.func @transform_5(%arg0: i32) -> (i32, i32) {
    %c0_i32 = arith.constant 0 : i32
    %c0_i32_0 = arith.constant 0 : i32
    %c0_i32_1 = arith.constant 0 : i32
    return %c0_i32, %c0_i32_0 : i32, i32
  }
  func.func @transform_6(%arg0: i32) -> (i32, i32) {
    %c0_i32 = arith.constant 0 : i32
    %c0_i32_0 = arith.constant 0 : i32
    %c0_i32_1 = arith.constant 0 : i32
    return %c0_i32, %c0_i32_0 : i32, i32
  }
  func.func @transform_7(%arg0: i32) -> (i32, i32) {
    %c0_i32 = arith.constant 0 : i32
    %c0_i32_0 = arith.constant 0 : i32
    return %c0_i32, %arg0 : i32, i32
  }
}

</mosaic_0001>

<llo_original>
// kernel: critic_forward.1
$region0: #{critic_forward.1}
  #allocation0 [shape = 'u32[]', space=smem, size = 0x4, offset = 0x4, fixed_abs, tag = 'smem constant byte address 0x4 - core index']
  #allocation1 [shape = 'u32[144,128]{1,0:T(1,128)}', space=vmem, size = 0x12000, scoped, tag = 'internal scratch']
  #allocation2 [shape = 'f32[1,1]{1,0:T(1,128)S(1)}', space=vmem, size = 0x200, scoped, tag = 'scoped memory for critic_forward.1']
  %s0 = inlined_call_operand.vmem [shape: bf16[16,128], index: 0, kind: input, shape index: {}]
  %s1 = inlined_call_operand.vmem [shape: bf16[128,16], index: 1, kind: input, shape index: {}]
  %s2 = inlined_call_operand.vmem [shape: f32[128,1], index: 2, kind: input, shape index: {}]
  %s3 = inlined_call_operand.vmem [shape: bf16[128,128], index: 3, kind: input, shape index: {}]
  %s4 = inlined_call_operand.vmem [shape: f32[128,1], index: 4, kind: input, shape index: {}]
  %s5 = inlined_call_operand.vmem [shape: f32[128,1], index: 5, kind: input, shape index: {}]
  %s6 = inlined_call_operand.<no memory space> [shape: f32[1,1], index: 6, kind: input, shape index: {}]
  %s7 = inlined_call_operand.vmem [shape: f32[1,128], index: 7, kind: output, shape index: {}]
  %s8 = sld [smem:[#allocation0]]
  $region38: #{critic_forward.1} parent=0
    _
  %s10 = ssub.s32 1, %s8
  %s11 = scalar_select 0, %s10, %s8
  %v12 = vstv %s6
  %13 = vst [vmem:[#allocation2] sm:$0x1] %v12
  // Predicated region
  $region2: #{critic_forward.1} parent=0 // pred_check
    _
  $region3: #{critic_forward.1} parent=0 // pred_check_branch
    %15 = sbr.rel (0) target = $region5
  $region4: #{critic_forward.1} parent=0 // pred_region
    _
  $region5: #{critic_forward.1} parent=0 // pred_fallthru
    _
  // Predicated region
  $region6: #{critic_forward.1} parent=0 // pred_check
    _
  $region7: #{critic_forward.1} parent=0 // pred_check_branch
    %17 = sbr.rel (0) target = $region9
  $region8: #{critic_forward.1} parent=0 // pred_region
    _
  $region9: #{critic_forward.1} parent=0 // pred_fallthru
    _
  // Predicated region
  $region10: #{critic_forward.1} parent=0 // pred_check
    _
  $region11: #{critic_forward.1} parent=0 // pred_check_branch
    %19 = sbr.rel (0) target = $region13
  $region12: #{critic_forward.1} parent=0 // pred_region
    _
  $region13: #{critic_forward.1} parent=0 // pred_fallthru
    _
  // Predicated region
  $region14: #{critic_forward.1} parent=0 // pred_check
    _
  $region15: #{critic_forward.1} parent=0 // pred_check_branch
    %21 = sbr.rel (0) target = $region17
  $region16: #{critic_forward.1} parent=0 // pred_region
    _
  $region17: #{critic_forward.1} parent=0 // pred_fallthru
    _
  // Predicated region
  $region18: #{critic_forward.1} parent=0 // pred_check
    _
  $region19: #{critic_forward.1} parent=0 // pred_check_branch
    %23 = sbr.rel (0) target = $region21
  $region20: #{critic_forward.1} parent=0 // pred_region
    _
  $region21: #{critic_forward.1} parent=0 // pred_fallthru
    _
  // Predicated region
  $region22: #{critic_forward.1} parent=0 // pred_check
    _
  $region23: #{critic_forward.1} parent=0 // pred_check_branch
    %25 = sbr.rel (0) target = $region25
  $region24: #{critic_forward.1} parent=0 // pred_region
    _
  $region25: #{critic_forward.1} parent=0 // pred_fallthru
    _
  // Predicated region
  $region26: #{critic_forward.1} parent=0 // pred_check
    _
  $region27: #{critic_forward.1} parent=0 // pred_check_branch
    %27 = sbr.rel (0) target = $region29
  $region28: #{critic_forward.1} parent=0 // pred_region
    _
  $region29: #{critic_forward.1} parent=0 // pred_fallthru
    _
  %v29 = vld [vmem:[%s0] sm:$0xf]
  %v30 = vld [vmem:[%s0 + $0x4] sm:$0xf]
  %v31 = vld [vmem:[%s1] sm:$0xf]
  %v32 = vld [vmem:[%s1 + $0x4] sm:$0xf]
  %v33 = vld [vmem:[%s1 + $0x8] sm:$0xf]
  %v34 = vld [vmem:[%s1 + $0xc] sm:$0xf]
  %v35 = vld [vmem:[%s1 + $0x10] sm:$0xf]
  %v36 = vld [vmem:[%s1 + $0x14] sm:$0xf]
  %v37 = vld [vmem:[%s1 + $0x18] sm:$0xf]
  %v38 = vld [vmem:[%s1 + $0x1c] sm:$0xf]
  %v39 = vld [vmem:[%s1 + $0x20] sm:$0xf]
  %v40 = vld [vmem:[%s1 + $0x24] sm:$0xf]
  %v41 = vld [vmem:[%s1 + $0x28] sm:$0xf]
  %v42 = vld [vmem:[%s1 + $0x2c] sm:$0xf]
  %v43 = vld [vmem:[%s1 + $0x30] sm:$0xf]
  %v44 = vld [vmem:[%s1 + $0x34] sm:$0xf]
  %v45 = vld [vmem:[%s1 + $0x38] sm:$0xf]
  %v46 = vld [vmem:[%s1 + $0x3c] sm:$0xf]
  %v47 = vld [vmem:[%s2] sm:$0xff]
  %v48 = vld [vmem:[%s2 + $0x8] sm:$0xff]
  %v49 = vld [vmem:[%s2 + $0x10] sm:$0xff]
  %v50 = vld [vmem:[%s2 + $0x18] sm:$0xff]
  %v51 = vld [vmem:[%s2 + $0x20] sm:$0xff]
  %v52 = vld [vmem:[%s2 + $0x28] sm:$0xff]
  %v53 = vld [vmem:[%s2 + $0x30] sm:$0xff]
  %v54 = vld [vmem:[%s2 + $0x38] sm:$0xff]
  %v55 = vld [vmem:[%s2 + $0x40] sm:$0xff]
  %v56 = vld [vmem:[%s2 + $0x48] sm:$0xff]
  %v57 = vld [vmem:[%s2 + $0x50] sm:$0xff]
  %v58 = vld [vmem:[%s2 + $0x58] sm:$0xff]
  %v59 = vld [vmem:[%s2 + $0x60] sm:$0xff]
  %v60 = vld [vmem:[%s2 + $0x68] sm:$0xff]
  %v61 = vld [vmem:[%s2 + $0x70] sm:$0xff]
  %v62 = vld [vmem:[%s2 + $0x78] sm:$0xff]
  %64 = vset.pattern.permute.xlu0 0
  %65 = vperm.xlu0 %64, %v47
  %v66 = vpop.permute.xlu0 %65
  %69 = vset.pattern.permute.xlu0 0
  %70 = vperm.xlu0 %69, %v48
  %v71 = vpop.permute.xlu0 %70
  %74 = vset.pattern.permute.xlu0 0
  %75 = vperm.xlu0 %74, %v49
  %v76 = vpop.permute.xlu0 %75
  %79 = vset.pattern.permute.xlu0 0
  %80 = vperm.xlu0 %79, %v50
  %v81 = vpop.permute.xlu0 %80
  %84 = vset.pattern.permute.xlu0 0
  %85 = vperm.xlu0 %84, %v51
  %v86 = vpop.permute.xlu0 %85
  %89 = vset.pattern.permute.xlu0 0
  %90 = vperm.xlu0 %89, %v52
  %v91 = vpop.permute.xlu0 %90
  %94 = vset.pattern.permute.xlu0 0
  %95 = vperm.xlu0 %94, %v53
  %v96 = vpop.permute.xlu0 %95
  %99 = vset.pattern.permute.xlu0 0
  %100 = vperm.xlu0 %99, %v54
  %v101 = vpop.permute.xlu0 %100
  %104 = vset.pattern.permute.xlu0 0
  %105 = vperm.xlu0 %104, %v55
  %v106 = vpop.permute.xlu0 %105
  %109 = vset.pattern.permute.xlu0 0
  %110 = vperm.xlu0 %109, %v56
  %v111 = vpop.permute.xlu0 %110
  %114 = vset.pattern.permute.xlu0 0
  %115 = vperm.xlu0 %114, %v57
  %v116 = vpop.permute.xlu0 %115
  %119 = vset.pattern.permute.xlu0 0
  %120 = vperm.xlu0 %119, %v58
  %v121 = vpop.permute.xlu0 %120
  %124 = vset.pattern.permute.xlu0 0
  %125 = vperm.xlu0 %124, %v59
  %v126 = vpop.permute.xlu0 %125
  %129 = vset.pattern.permute.xlu0 0
  %130 = vperm.xlu0 %129, %v60
  %v131 = vpop.permute.xlu0 %130
  %134 = vset.pattern.permute.xlu0 0
  %135 = vperm.xlu0 %134, %v61
  %v136 = vpop.permute.xlu0 %135
  %139 = vset.pattern.permute.xlu0 0
  %140 = vperm.xlu0 %139, %v62
  %v141 = vpop.permute.xlu0 %140
  %v159 = vunpack.c.l.b16 %v31
  %v160 = vunpack.c.l.b16 %v32
  %v161 = vunpack.c.l.b16 %v33
  %v162 = vunpack.c.l.b16 %v34
  %v163 = vunpack.c.l.b16 %v35
  %v164 = vunpack.c.l.b16 %v36
  %v165 = vunpack.c.l.b16 %v37
  %v166 = vunpack.c.l.b16 %v38
  %v167 = vunpack.c.l.b16 %v39
  %v168 = vunpack.c.l.b16 %v40
  %v169 = vunpack.c.l.b16 %v41
  %v170 = vunpack.c.l.b16 %v42
  %v171 = vunpack.c.l.b16 %v43
  %v172 = vunpack.c.l.b16 %v44
  %v173 = vunpack.c.l.b16 %v45
  %v174 = vunpack.c.l.b16 %v46
  %v175 = vpack.c.b16 %v160, %v159
  %v176 = vpack.c.b16 %v162, %v161
  %v177 = vpack.c.b16 %v164, %v163
  %v178 = vpack.c.b16 %v166, %v165
  %v179 = vpack.c.b16 %v168, %v167
  %v180 = vpack.c.b16 %v170, %v169
  %v181 = vpack.c.b16 %v172, %v171
  %v182 = vpack.c.b16 %v174, %v173
  %v185 = vunpack.c.l.b16 %v29
  %v186 = vunpack.c.l.b16 %v30
  %v187 = vpack.c.b16 %v186, %v185
  %vm189 = vcmask 130048
  %v191 = vsel %vm189, %v175, 0
  %v194 = vsel %vm189, %v176, 0
  %v197 = vsel %vm189, %v177, 0
  %v200 = vsel %vm189, %v178, 0
  %v203 = vsel %vm189, %v179, 0
  %v206 = vsel %vm189, %v180, 0
  %v209 = vsel %vm189, %v181, 0
  %v212 = vsel %vm189, %v182, 0
  %214 = vmatprep.subr.bf16.mxu0 0
  %215 = vmatpush1.bf16.msra.mxu0 %v187
  %216 = vmatprep.subr.bf16.mxu0 0
  %217 = vmatpush1.bf16.msra.mxu0 0
  %218 = vmatprep.subr.bf16.mxu0 0
  %219 = vmatpush1.bf16.msra.mxu0 0
  %220 = vmatprep.subr.bf16.mxu0 0
  %221 = vmatpush1.bf16.msra.mxu0 0
  %222 = vmatprep.subr.bf16.mxu0 0
  %223 = vmatpush1.bf16.msra.mxu0 0
  %224 = vmatprep.subr.bf16.mxu0 0
  %225 = vmatpush1.bf16.msra.mxu0 0
  %226 = vmatprep.subr.bf16.mxu0 0
  %227 = vmatpush1.bf16.msra.mxu0 0
  %228 = vmatprep.subr.bf16.mxu0 0
  %229 = vmatpush1.bf16.msra.mxu0 0
  %230 = vmatprep.subr.bf16.mxu0 0
  %231 = vmatpush1.bf16.msra.mxu0 0
  %232 = vmatprep.subr.bf16.mxu0 0
  %233 = vmatpush1.bf16.msra.mxu0 0
  %234 = vmatprep.subr.bf16.mxu0 0
  %235 = vmatpush1.bf16.msra.mxu0 0
  %236 = vmatprep.subr.bf16.mxu0 0
  %237 = vmatpush1.bf16.msra.mxu0 0
  %238 = vmatprep.subr.bf16.mxu0 0
  %239 = vmatpush1.bf16.msra.mxu0 0
  %240 = vmatprep.subr.bf16.mxu0 0
  %241 = vmatpush1.bf16.msra.mxu0 0
  %242 = vmatprep.subr.bf16.mxu0 0
  %243 = vmatpush1.bf16.msra.mxu0 0
  %244 = vmatprep.subr.bf16.mxu0 0
  %245 = vmatpush1.bf16.msra.mxu0 0
  %246 = vmatprep.mubr.bf16.mxu0 0
  %247 = vmatmul.mubr.bf16.gmra.mrb[0].mxu0 %v191
  %v248 = vpop.f32.mrb[0].mxu0
  %v249 = vadd.f32 %v66, %v248
  %v250 = vpop.f32.mrb[0].mxu0
  %v251 = vpop.f32.mrb[0].mxu0
  %v252 = vadd.f32 %v71, %v251
  %v253 = vpop.f32.mrb[0].mxu0
  %254 = vmatprep.mubr.bf16.mxu0 0
  %255 = vmatmul.mubr.bf16.gmra.mrb[0].mxu0 %v194
  %v256 = vpop.f32.mrb[0].mxu0
  %v257 = vadd.f32 %v76, %v256
  %v258 = vpop.f32.mrb[0].mxu0
  %v259 = vpop.f32.mrb[0].mxu0
  %v260 = vadd.f32 %v81, %v259
  %v261 = vpop.f32.mrb[0].mxu0
  %262 = vmatprep.mubr.bf16.mxu0 0
  %263 = vmatmul.mubr.bf16.gmra.mrb[0].mxu0 %v197
  %v264 = vpop.f32.mrb[0].mxu0
  %v265 = vadd.f32 %v86, %v264
  %v266 = vpop.f32.mrb[0].mxu0
  %v267 = vpop.f32.mrb[0].mxu0
  %v268 = vadd.f32 %v91, %v267
  %v269 = vpop.f32.mrb[0].mxu0
  %270 = vmatprep.mubr.bf16.mxu0 0
  %271 = vmatmul.mubr.bf16.gmra.mrb[0].mxu0 %v200
  %v272 = vpop.f32.mrb[0].mxu0
  %v273 = vadd.f32 %v96, %v272
  %v274 = vpop.f32.mrb[0].mxu0
  %v275 = vpop.f32.mrb[0].mxu0
  %v276 = vadd.f32 %v101, %v275
  %v277 = vpop.f32.mrb[0].mxu0
  %278 = vmatprep.mubr.bf16.mxu0 0
  %279 = vmatmul.mubr.bf16.gmra.mrb[0].mxu0 %v203
  %v280 = vpop.f32.mrb[0].mxu0
  %v281 = vadd.f32 %v106, %v280
  %v282 = vpop.f32.mrb[0].mxu0
  %v283 = vpop.f32.mrb[0].mxu0
  %v284 = vadd.f32 %v111, %v283
  %v285 = vpop.f32.mrb[0].mxu0
  %286 = vmatprep.mubr.bf16.mxu0 0
  %287 = vmatmul.mubr.bf16.gmra.mrb[0].mxu0 %v206
  %v288 = vpop.f32.mrb[0].mxu0
  %v289 = vadd.f32 %v116, %v288
  %v290 = vpop.f32.mrb[0].mxu0
  %v291 = vpop.f32.mrb[0].mxu0
  %v292 = vadd.f32 %v121, %v291
  %v293 = vpop.f32.mrb[0].mxu0
  %294 = vmatprep.mubr.bf16.mxu0 0
  %295 = vmatmul.mubr.bf16.gmra.mrb[0].mxu0 %v209
  %v296 = vpop.f32.mrb[0].mxu0
  %v297 = vadd.f32 %v126, %v296
  %v298 = vpop.f32.mrb[0].mxu0
  %v299 = vpop.f32.mrb[0].mxu0
  %v300 = vadd.f32 %v131, %v299
  %v301 = vpop.f32.mrb[0].mxu0
  %302 = vmatprep.mubr.bf16.mxu0 0
  %303 = vmatmul.mubr.bf16.gmra.mrb[0].mxu0 %v212
  %v304 = vpop.f32.mrb[0].mxu0
  %v305 = vadd.f32 %v136, %v304
  %v306 = vpop.f32.mrb[0].mxu0
  %v307 = vpop.f32.mrb[0].mxu0
  %v308 = vadd.f32 %v141, %v307
  %v309 = vpop.f32.mrb[0].mxu0
  %310 = vdwg.mxu0
  %v311 = vtanh.pop %v249
  %v312 = vtanh.pop %v252
  %v313 = vtanh.pop %v257
  %v314 = vtanh.pop %v260
  %v315 = vtanh.pop %v265
  %v316 = vtanh.pop %v268
  %v317 = vtanh.pop %v273
  %v318 = vtanh.pop %v276
  %v319 = vtanh.pop %v281
  %v320 = vtanh.pop %v284
  %v321 = vtanh.pop %v289
  %v322 = vtanh.pop %v292
  %v323 = vtanh.pop %v297
  %v324 = vtanh.pop %v300
  %v325 = vtanh.pop %v305
  %v326 = vtanh.pop %v308
  %v327 = vld [vmem:[%s3] sm:$0xf]
  %v328 = vld [vmem:[%s3 + $0x4] sm:$0xf]
  %v329 = vld [vmem:[%s3 + $0x8] sm:$0xf]
  %v330 = vld [vmem:[%s3 + $0xc] sm:$0xf]
  %v331 = vld [vmem:[%s3 + $0x10] sm:$0xf]
  %v332 = vld [vmem:[%s3 + $0x14] sm:$0xf]
  %v333 = vld [vmem:[%s3 + $0x18] sm:$0xf]
  %v334 = vld [vmem:[%s3 + $0x1c] sm:$0xf]
  %v335 = vld [vmem:[%s3 + $0x20] sm:$0xf]
  %v336 = vld [vmem:[%s3 + $0x24] sm:$0xf]
  %v337 = vld [vmem:[%s3 + $0x28] sm:$0xf]
  %v338 = vld [vmem:[%s3 + $0x2c] sm:$0xf]
  %v339 = vld [vmem:[%s3 + $0x30] sm:$0xf]
  %v340 = vld [vmem:[%s3 + $0x34] sm:$0xf]
  %v341 = vld [vmem:[%s3 + $0x38] sm:$0xf]
  %v342 = vld [vmem:[%s3 + $0x3c] sm:$0xf]
  %v343 = vpack.c.bf16 %v312, %v311
  %v344 = vpack.c.bf16 %v314, %v313
  %v345 = vpack.c.bf16 %v316, %v315
  %v346 = vpack.c.bf16 %v318, %v317
  %v347 = vpack.c.bf16 %v320, %v319
  %v348 = vpack.c.bf16 %v322, %v321
  %v349 = vpack.c.bf16 %v324, %v323
  %v350 = vpack.c.bf16 %v326, %v325
  %v351 = vld [vmem:[%s4] sm:$0xff]
  %v352 = vld [vmem:[%s4 + $0x8] sm:$0xff]
  %v353 = vld [vmem:[%s4 + $0x10] sm:$0xff]
  %v354 = vld [vmem:[%s4 + $0x18] sm:$0xff]
  %v355 = vld [vmem:[%s4 + $0x20] sm:$0xff]
  %v356 = vld [vmem:[%s4 + $0x28] sm:$0xff]
  %v357 = vld [vmem:[%s4 + $0x30] sm:$0xff]
  %v358 = vld [vmem:[%s4 + $0x38] sm:$0xff]
  %v359 = vld [vmem:[%s4 + $0x40] sm:$0xff]
  %v360 = vld [vmem:[%s4 + $0x48] sm:$0xff]
  %v361 = vld [vmem:[%s4 + $0x50] sm:$0xff]
  %v362 = vld [vmem:[%s4 + $0x58] sm:$0xff]
  %v363 = vld [vmem:[%s4 + $0x60] sm:$0xff]
  %v364 = vld [vmem:[%s4 + $0x68] sm:$0xff]
  %v365 = vld [vmem:[%s4 + $0x70] sm:$0xff]
  %v366 = vld [vmem:[%s4 + $0x78] sm:$0xff]
  %368 = vset.pattern.permute.xlu0 0
  %369 = vperm.xlu0 %368, %v351
  %v370 = vpop.permute.xlu0 %369
  %373 = vset.pattern.permute.xlu0 0
  %374 = vperm.xlu0 %373, %v352
  %v375 = vpop.permute.xlu0 %374
  %378 = vset.pattern.permute.xlu0 0
  %379 = vperm.xlu0 %378, %v353
  %v380 = vpop.permute.xlu0 %379
  %383 = vset.pattern.permute.xlu0 0
  %384 = vperm.xlu0 %383, %v354
  %v385 = vpop.permute.xlu0 %384
  %388 = vset.pattern.permute.xlu0 0
  %389 = vperm.xlu0 %388, %v355
  %v390 = vpop.permute.xlu0 %389
  %393 = vset.pattern.permute.xlu0 0
  %394 = vperm.xlu0 %393, %v356
  %v395 = vpop.permute.xlu0 %394
  %398 = vset.pattern.permute.xlu0 0
  %399 = vperm.xlu0 %398, %v357
  %v400 = vpop.permute.xlu0 %399
  %403 = vset.pattern.permute.xlu0 0
  %404 = vperm.xlu0 %403, %v358
  %v405 = vpop.permute.xlu0 %404
  %408 = vset.pattern.permute.xlu0 0
  %409 = vperm.xlu0 %408, %v359
  %v410 = vpop.permute.xlu0 %409
  %413 = vset.pattern.permute.xlu0 0
  %414 = vperm.xlu0 %413, %v360
  %v415 = vpop.permute.xlu0 %414
  %418 = vset.pattern.permute.xlu0 0
  %419 = vperm.xlu0 %418, %v361
  %v420 = vpop.permute.xlu0 %419
  %423 = vset.pattern.permute.xlu0 0
  %424 = vperm.xlu0 %423, %v362
  %v425 = vpop.permute.xlu0 %424
  %428 = vset.pattern.permute.xlu0 0
  %429 = vperm.xlu0 %428, %v363
  %v430 = vpop.permute.xlu0 %429
  %433 = vset.pattern.permute.xlu0 0
  %434 = vperm.xlu0 %433, %v364
  %v435 = vpop.permute.xlu0 %434
  %438 = vset.pattern.permute.xlu0 0
  %439 = vperm.xlu0 %438, %v365
  %v440 = vpop.permute.xlu0 %439
  %443 = vset.pattern.permute.xlu0 0
  %444 = vperm.xlu0 %443, %v366
  %v445 = vpop.permute.xlu0 %444
  %v463 = vunpack.c.l.b16 %v327
  %v464 = vunpack.c.l.b16 %v328
  %v465 = vunpack.c.l.b16 %v329
  %v466 = vunpack.c.l.b16 %v330
  %v467 = vunpack.c.l.b16 %v331
  %v468 = vunpack.c.l.b16 %v332
  %v469 = vunpack.c.l.b16 %v333
  %v470 = vunpack.c.l.b16 %v334
  %v471 = vunpack.c.l.b16 %v335
  %v472 = vunpack.c.l.b16 %v336
  %v473 = vunpack.c.l.b16 %v337
  %v474 = vunpack.c.l.b16 %v338
  %v475 = vunpack.c.l.b16 %v339
  %v476 = vunpack.c.l.b16 %v340
  %v477 = vunpack.c.l.b16 %v341
  %v478 = vunpack.c.l.b16 %v342
  %v479 = vpack.c.b16 %v464, %v463
  %v480 = vpack.c.b16 %v466, %v465
  %v481 = vpack.c.b16 %v468, %v467
  %v482 = vpack.c.b16 %v470, %v469
  %v483 = vpack.c.b16 %v472, %v471
  %v484 = vpack.c.b16 %v474, %v473
  %v485 = vpack.c.b16 %v476, %v475
  %v486 = vpack.c.b16 %v478, %v477
  %495 = vmatprep.subr.bf16.mxu0 0
  %496 = vmatpush1.bf16.msra.mxu0 %v343
  %497 = vmatprep.subr.bf16.mxu0 0
  %498 = vmatpush1.bf16.msra.mxu0 %v344
  %499 = vmatprep.subr.bf16.mxu0 0
  %500 = vmatpush1.bf16.msra.mxu0 %v345
  %501 = vmatprep.subr.bf16.mxu0 0
  %502 = vmatpush1.bf16.msra.mxu0 %v346
  %503 = vmatprep.subr.bf16.mxu0 0
  %504 = vmatpush1.bf16.msra.mxu0 %v347
  %505 = vmatprep.subr.bf16.mxu0 0
  %506 = vmatpush1.bf16.msra.mxu0 %v348
  %507 = vmatprep.subr.bf16.mxu0 0
  %508 = vmatpush1.bf16.msra.mxu0 %v349
  %509 = vmatprep.subr.bf16.mxu0 0
  %510 = vmatpush1.bf16.msra.mxu0 %v350
  %511 = vmatprep.subr.bf16.mxu0 0
  %512 = vmatpush1.bf16.msra.mxu0 0
  %513 = vmatprep.subr.bf16.mxu0 0
  %514 = vmatpush1.bf16.msra.mxu0 0
  %515 = vmatprep.subr.bf16.mxu0 0
  %516 = vmatpush1.bf16.msra.mxu0 0
  %517 = vmatprep.subr.bf16.mxu0 0
  %518 = vmatpush1.bf16.msra.mxu0 0
  %519 = vmatprep.subr.bf16.mxu0 0
  %520 = vmatpush1.bf16.msra.mxu0 0
  %521 = vmatprep.subr.bf16.mxu0 0
  %522 = vmatpush1.bf16.msra.mxu0 0
  %523 = vmatprep.subr.bf16.mxu0 0
  %524 = vmatpush1.bf16.msra.mxu0 0
  %525 = vmatprep.subr.bf16.mxu0 0
  %526 = vmatpush1.bf16.msra.mxu0 0
  %527 = vmatprep.mubr.bf16.mxu0 0
  %528 = vmatmul.mubr.bf16.gmra.mrb[0].mxu0 %v479
  %v529 = vpop.f32.mrb[0].mxu0
  %v530 = vadd.f32 %v370, %v529
  %v531 = vpop.f32.mrb[0].mxu0
  %v532 = vpop.f32.mrb[0].mxu0
  %v533 = vadd.f32 %v375, %v532
  %v534 = vpop.f32.mrb[0].mxu0
  %535 = vmatprep.mubr.bf16.mxu0 0
  %536 = vmatmul.mubr.bf16.gmra.mrb[0].mxu0 %v480
  %v537 = vpop.f32.mrb[0].mxu0
  %v538 = vadd.f32 %v380, %v537
  %v539 = vpop.f32.mrb[0].mxu0
  %v540 = vpop.f32.mrb[0].mxu0
  %v541 = vadd.f32 %v385, %v540
  %v542 = vpop.f32.mrb[0].mxu0
  %543 = vmatprep.mubr.bf16.mxu0 0
  %544 = vmatmul.mubr.bf16.gmra.mrb[0].mxu0 %v481
  %v545 = vpop.f32.mrb[0].mxu0
  %v546 = vadd.f32 %v390, %v545
  %v547 = vpop.f32.mrb[0].mxu0
  %v548 = vpop.f32.mrb[0].mxu0
  %v549 = vadd.f32 %v395, %v548
  %v550 = vpop.f32.mrb[0].mxu0
  %551 = vmatprep.mubr.bf16.mxu0 0
  %552 = vmatmul.mubr.bf16.gmra.mrb[0].mxu0 %v482
  %v553 = vpop.f32.mrb[0].mxu0
  %v554 = vadd.f32 %v400, %v553
  %v555 = vpop.f32.mrb[0].mxu0
  %v556 = vpop.f32.mrb[0].mxu0
  %v557 = vadd.f32 %v405, %v556
  %v558 = vpop.f32.mrb[0].mxu0
  %559 = vmatprep.mubr.bf16.mxu0 0
  %560 = vmatmul.mubr.bf16.gmra.mrb[0].mxu0 %v483
  %v561 = vpop.f32.mrb[0].mxu0
  %v562 = vadd.f32 %v410, %v561
  %v563 = vpop.f32.mrb[0].mxu0
  %v564 = vpop.f32.mrb[0].mxu0
  %v565 = vadd.f32 %v415, %v564
  %v566 = vpop.f32.mrb[0].mxu0
  %567 = vmatprep.mubr.bf16.mxu0 0
  %568 = vmatmul.mubr.bf16.gmra.mrb[0].mxu0 %v484
  %v569 = vpop.f32.mrb[0].mxu0
  %v570 = vadd.f32 %v420, %v569
  %v571 = vpop.f32.mrb[0].mxu0
  %v572 = vpop.f32.mrb[0].mxu0
  %v573 = vadd.f32 %v425, %v572
  %v574 = vpop.f32.mrb[0].mxu0
  %575 = vmatprep.mubr.bf16.mxu0 0
  %576 = vmatmul.mubr.bf16.gmra.mrb[0].mxu0 %v485
  %v577 = vpop.f32.mrb[0].mxu0
  %v578 = vadd.f32 %v430, %v577
  %v579 = vpop.f32.mrb[0].mxu0
  %v580 = vpop.f32.mrb[0].mxu0
  %v581 = vadd.f32 %v435, %v580
  %v582 = vpop.f32.mrb[0].mxu0
  %583 = vmatprep.mubr.bf16.mxu0 0
  %584 = vmatmul.mubr.bf16.gmra.mrb[0].mxu0 %v486
  %v585 = vpop.f32.mrb[0].mxu0
  %v586 = vadd.f32 %v440, %v585
  %v587 = vpop.f32.mrb[0].mxu0
  %v588 = vpop.f32.mrb[0].mxu0
  %v589 = vadd.f32 %v445, %v588
  %v590 = vpop.f32.mrb[0].mxu0
  %591 = vdwg.mxu0
  %v592 = vtanh.pop %v530
  %v593 = vtanh.pop %v533
  %v594 = vtanh.pop %v538
  %v595 = vtanh.pop %v541
  %v596 = vtanh.pop %v546
  %v597 = vtanh.pop %v549
  %v598 = vtanh.pop %v554
  %v599 = vtanh.pop %v557
  %v600 = vtanh.pop %v562
  %v601 = vtanh.pop %v565
  %v602 = vtanh.pop %v570
  %v603 = vtanh.pop %v573
  %v604 = vtanh.pop %v578
  %v605 = vtanh.pop %v581
  %v606 = vtanh.pop %v586
  %v607 = vtanh.pop %v589
  %v608 = vld [vmem:[%s5] sm:$0xff]
  %v609 = vld [vmem:[%s5 + $0x8] sm:$0xff]
  %v610 = vld [vmem:[%s5 + $0x10] sm:$0xff]
  %v611 = vld [vmem:[%s5 + $0x18] sm:$0xff]
  %v612 = vld [vmem:[%s5 + $0x20] sm:$0xff]
  %v613 = vld [vmem:[%s5 + $0x28] sm:$0xff]
  %v614 = vld [vmem:[%s5 + $0x30] sm:$0xff]
  %v615 = vld [vmem:[%s5 + $0x38] sm:$0xff]
  %v616 = vld [vmem:[%s5 + $0x40] sm:$0xff]
  %v617 = vld [vmem:[%s5 + $0x48] sm:$0xff]
  %v618 = vld [vmem:[%s5 + $0x50] sm:$0xff]
  %v619 = vld [vmem:[%s5 + $0x58] sm:$0xff]
  %v620 = vld [vmem:[%s5 + $0x60] sm:$0xff]
  %v621 = vld [vmem:[%s5 + $0x68] sm:$0xff]
  %v622 = vld [vmem:[%s5 + $0x70] sm:$0xff]
  %v623 = vld [vmem:[%s5 + $0x78] sm:$0xff]
  %625 = vset.pattern.permute.xlu0 0
  %626 = vperm.xlu0 %625, %v608
  %v627 = vpop.permute.xlu0 %626
  %630 = vset.pattern.permute.xlu0 0
  %631 = vperm.xlu0 %630, %v609
  %v632 = vpop.permute.xlu0 %631
  %635 = vset.pattern.permute.xlu0 0
  %636 = vperm.xlu0 %635, %v610
  %v637 = vpop.permute.xlu0 %636
  %640 = vset.pattern.permute.xlu0 0
  %641 = vperm.xlu0 %640, %v611
  %v642 = vpop.permute.xlu0 %641
  %645 = vset.pattern.permute.xlu0 0
  %646 = vperm.xlu0 %645, %v612
  %v647 = vpop.permute.xlu0 %646
  %650 = vset.pattern.permute.xlu0 0
  %651 = vperm.xlu0 %650, %v613
  %v652 = vpop.permute.xlu0 %651
  %655 = vset.pattern.permute.xlu0 0
  %656 = vperm.xlu0 %655, %v614
  %v657 = vpop.permute.xlu0 %656
  %660 = vset.pattern.permute.xlu0 0
  %661 = vperm.xlu0 %660, %v615
  %v662 = vpop.permute.xlu0 %661
  %665 = vset.pattern.permute.xlu0 0
  %666 = vperm.xlu0 %665, %v616
  %v667 = vpop.permute.xlu0 %666
  %670 = vset.pattern.permute.xlu0 0
  %671 = vperm.xlu0 %670, %v617
  %v672 = vpop.permute.xlu0 %671
  %675 = vset.pattern.permute.xlu0 0
  %676 = vperm.xlu0 %675, %v618
  %v677 = vpop.permute.xlu0 %676
  %680 = vset.pattern.permute.xlu0 0
  %681 = vperm.xlu0 %680, %v619
  %v682 = vpop.permute.xlu0 %681
  %685 = vset.pattern.permute.xlu0 0
  %686 = vperm.xlu0 %685, %v620
  %v687 = vpop.permute.xlu0 %686
  %690 = vset.pattern.permute.xlu0 0
  %691 = vperm.xlu0 %690, %v621
  %v692 = vpop.permute.xlu0 %691
  %695 = vset.pattern.permute.xlu0 0
  %696 = vperm.xlu0 %695, %v622
  %v697 = vpop.permute.xlu0 %696
  %700 = vset.pattern.permute.xlu0 0
  %701 = vperm.xlu0 %700, %v623
  %v702 = vpop.permute.xlu0 %701
  %v704 = vmul.f32 %v592, %v627
  %v705 = vmul.f32 %v593, %v632
  %v706 = vmul.f32 %v594, %v637
  %v707 = vmul.f32 %v595, %v642
  %v708 = vmul.f32 %v596, %v647
  %v709 = vmul.f32 %v597, %v652
  %v710 = vmul.f32 %v598, %v657
  %v711 = vmul.f32 %v599, %v662
  %v712 = vmul.f32 %v600, %v667
  %v713 = vmul.f32 %v601, %v672
  %v714 = vmul.f32 %v602, %v677
  %v715 = vmul.f32 %v603, %v682
  %v716 = vmul.f32 %v604, %v687
  %v717 = vmul.f32 %v605, %v692
  %v718 = vmul.f32 %v606, %v697
  %v719 = vmul.f32 %v607, %v702
  %v720 = vadd.f32 %v704, %v705
  %v721 = vadd.f32 %v720, %v706
  %v722 = vadd.f32 %v721, %v707
  %v723 = vadd.f32 %v722, %v708
  %v724 = vadd.f32 %v723, %v709
  %v725 = vadd.f32 %v724, %v710
  %v726 = vadd.f32 %v725, %v711
  %v727 = vadd.f32 %v726, %v712
  %v728 = vadd.f32 %v727, %v713
  %v729 = vadd.f32 %v728, %v714
  %v730 = vadd.f32 %v729, %v715
  %v731 = vadd.f32 %v730, %v716
  %v732 = vadd.f32 %v731, %v717
  %v733 = vadd.f32 %v732, %v718
  %v734 = vadd.f32 %v733, %v719
  %v735 = vrot.slane %v734, 4
  %v736 = vadd.f32 %v734, %v735
  %v737 = vrot.slane %v736, 2
  %v738 = vadd.f32 %v736, %v737
  %v739 = vrot.slane %v738, 1
  %v740 = vadd.f32 %v738, %v739
  %v741 = vld [vmem:[#allocation2] sm:$0x1]
  %743 = vset.pattern.permute.xlu0 0
  %744 = vperm.xlu0 %743, %v741
  %v745 = vpop.permute.xlu0 %744
  %v747 = vlaneseq
  %v748 = vshrl.u32 %v747, 7
  %v749 = vsub.s32 0, %v748
  %v750 = vrot.slane %v745, %v749
  %v751 = vadd.f32 %v740, %v750
  %752 = vst [vmem:[%s7] sm:$0x1] %v751
  // Predicated region
  $region30: #{critic_forward.1} parent=0 // pred_check
    _
  $region31: #{critic_forward.1} parent=0 // pred_check_branch
    %754 = sbr.rel (0) target = $region33
  $region32: #{critic_forward.1} parent=0 // pred_region
    _
  $region33: #{critic_forward.1} parent=0 // pred_fallthru
    _
  // Predicated region
  $region34: #{critic_forward.1} parent=0 // pred_check
    _
  $region35: #{critic_forward.1} parent=0 // pred_check_branch
    %756 = sbr.rel (0) target = $region37
  $region36: #{critic_forward.1} parent=0 // pred_region
    _
  $region37: #{critic_forward.1} parent=0 // pred_fallthru
    _

</llo_original>
